<compile_context>
chip_gen: v6e
topology: v6e:2x2x1
jax: 0.10.0
libtpu: 0.0.40
codegen_flags: <defaults>
</compile_context>

<pallas_src>
import math

import jax
import jax.numpy as jnp
from jax.experimental import pallas as pl
from jax.experimental.pallas import tpu as pltpu


# Fixed Onekernel weight, baked into the kernel as compile-time constants.
_W_CENTER = 5.25    # centre tap
_W_EDGE = -0.75     # up / down / left / right
_W_CORNER = -0.5    # 4 corners

ONEKERNEL_WEIGHT = jnp.array(
    [[[[_W_CORNER, _W_EDGE, _W_CORNER],
       [_W_EDGE, _W_CENTER, _W_EDGE],
       [_W_CORNER, _W_EDGE, _W_CORNER]]]],
    dtype=jnp.float32,
)


def _sharpen_kernel(x_ref, lmask_ref, rmask_ref, tmask_ref, bmask_ref, o_ref):
    """3x3 sharpening stencil with fused zero padding on a lane-dense (H, tn*W) block.

    Images are stacked along the lane axis, so horizontal (+-1 lane) neighbours are built with
    XLU rolls and zeroed at each image's left/right edge by the (1, lanes) multiplicative masks;
    vertical (+-1 sublane) neighbours are zeroed at row 0 / row H-1 by the (H, 1) masks.
    Factored by weight symmetry: hsum = L + R; mid = 5.25*x - 0.75*hsum;
    adj = -0.75*x - 0.5*hsum; y = mid + up(adj) + down(adj).
    """
    x = x_ref[...]
    rows, lanes = x.shape

    lmask = lmask_ref[...]   # (1, lanes): 0 at each image's first column
    rmask = rmask_ref[...]   # (1, lanes): 0 at each image's last column
    tmask = tmask_ref[...]   # (rows, 1): 0 at row 0
    bmask = bmask_ref[...]   # (rows, 1): 0 at row H-1

    # Horizontal neighbours with zero boundary (XLU rolls + one multiply each).
    left = pltpu.roll(x, 1, axis=1) * lmask                # x[:, j-1]
    right = pltpu.roll(x, lanes - 1, axis=1) * rmask       # x[:, j+1]
    hsum = left + right

    mid = _W_CENTER * x + _W_EDGE * hsum   # contribution of the centre row
    adj = _W_EDGE * x + _W_CORNER * hsum   # contribution pattern of the row above / below

    # Vertical neighbours of adj, zeroed at the image's first / last row.
    up = pltpu.roll(adj, 1, axis=0) * tmask                # adj[i-1, :]
    down = pltpu.roll(adj, rows - 1, axis=0) * bmask       # adj[i+1, :]

    o_ref[...] = (mid + up + down).astype(o_ref.dtype)


def _pick_images_per_block(n, h, w, dtype_bytes=4, target_bytes=2 * 1024 * 1024):
    """Images per lane-block for the (H, N*W) layout.

    Block = (H, tn*W); tn*W must be a multiple of 128 unless tn == n (full lane extent).
    ~2 MiB blocks hit the >=85%-of-HBM-roofline sweet spot while in+out double buffers stay
    inside every generation's scoped-VMEM limit.  When the whole batch would fit a single block
    we still try to emit >=2 grid steps so v7x can shard across its 2 TensorCores.
    """
    lane_step = 128 // math.gcd(w, 128)            # smallest tn with (tn*w) % 128 == 0
    per_image = max(h * w * dtype_bytes, 1)
    tn = max(1, target_bytes // per_image)
    tn = (tn // lane_step) * lane_step             # keep block lane width 128-aligned
    if tn == 0:
        # A single lane-aligned group exceeds the target; take the smallest aligned block.
        # TODO(synk): images so large that even `lane_step` of them overflow VMEM need halo
        # row-tiling along H; not needed for the shapes exercised here.
        tn = lane_step
    if tn >= n:
        # Whole batch fits one block: split in two for v7x's 2 TCs if alignment allows.
        half = ((n // 2) // lane_step) * lane_step
        return half if half >= lane_step else n
    return tn


def onekernel_forward(x):
    """x: (N, 1, H, W) float32.  Returns (conv2d(x, W3x3, padding=1, bias=False), W3x3),
    matching Onekernel.forward with its hard-coded weight."""
    n, c, h, w = x.shape
    assert c == 1, "Onekernel.conv1 has a single input channel"

    # Lane-dense repack: (N,1,H,W) -> (H, N*W).  Pure layout plumbing so every vreg / DMA /
    # store in the kernel uses dense 128-lane rows even when W < 128.
    xf = x.astype(jnp.float32)
    x2d = xf.reshape(n, h, w).transpose(1, 0, 2).reshape(h, n * w)

    tn = _pick_images_per_block(n, h, w)
    lanes = tn * w
    assert lanes % 128 == 0 or tn == n, "block lane width must be 128-aligned or full extent"
    grid = (pl.cdiv(n, tn),)

    # Precomputed 0/1 boundary masks (applied with one multiply each inside the kernel).
    col = jnp.arange(lanes, dtype=jnp.int32) % w
    lmask = (col != 0).astype(jnp.float32).reshape(1, lanes)
    rmask = (col != w - 1).astype(jnp.float32).reshape(1, lanes)
    row = jnp.arange(h, dtype=jnp.int32)
    tmask = (row != 0).astype(jnp.float32).reshape(h, 1)
    bmask = (row != h - 1).astype(jnp.float32).reshape(h, 1)

    y2d = pl.pallas_call(
        _sharpen_kernel,
        out_shape=jax.ShapeDtypeStruct((h, n * w), jnp.float32),
        grid=grid,
        in_specs=[
            pl.BlockSpec((h, lanes), lambda b: (0, b)),   # x block: all rows, tn images of lanes
            pl.BlockSpec((1, lanes), lambda b: (0, 0)),   # lmask (same for every block)
            pl.BlockSpec((1, lanes), lambda b: (0, 0)),   # rmask
            pl.BlockSpec((h, 1), lambda b: (0, 0)),       # tmask
            pl.BlockSpec((h, 1), lambda b: (0, 0)),       # bmask
        ],
        out_specs=pl.BlockSpec((h, lanes), lambda b: (0, b)),
        compiler_params=pltpu.CompilerParams(
            dimension_semantics=("parallel",),
            vmem_limit_bytes=32 * 1024 * 1024,
        ),
    )(x2d, lmask, rmask, tmask, bmask)

    y = y2d.reshape(h, n, w).transpose(1, 0, 2).reshape(n, 1, h, w)
    return y, ONEKERNEL_WEIGHT


if __name__ == "__main__":
    # Small deterministic input consistent with the module: NCHW with C=1.
    key = jax.random.PRNGKey(0)
    x = jax.random.normal(key, (8, 1, 16, 16), dtype=jnp.float32)

    y, w_out = onekernel_forward(x)
    y = jax.block_until_ready(y)
    w_out = jax.block_until_ready(w_out)

    # Sanity check against XLA's conv (reference), tolerance-assert.
    y_ref = jax.lax.conv_general_dilated(
        x, ONEKERNEL_WEIGHT, window_strides=(1, 1), padding=((1, 1), (1, 1)),
        dimension_numbers=("NCHW", "OIHW", "NCHW"),
    )
    assert y.shape == x.shape
    assert jnp.allclose(y, y_ref, atol=1e-5, rtol=1e-5)
    assert w_out.shape == (1, 1, 3, 3)
    assert jnp.array_equal(w_out, ONEKERNEL_WEIGHT)

    print("KERNEL_OK")
</pallas_src>

<mosaic_0001>
module attributes {stable_mosaic.version = 11 : i64} {
  func.func @_sharpen_kernel(%arg0: i32, %arg1: memref<16x128xf32, #tpu.memory_space<vmem>>, %arg2: memref<1x128xf32, #tpu.memory_space<vmem>>, %arg3: memref<1x128xf32, #tpu.memory_space<vmem>>, %arg4: memref<16x1xf32, #tpu.memory_space<vmem>>, %arg5: memref<16x1xf32, #tpu.memory_space<vmem>>, %arg6: memref<16x128xf32, #tpu.memory_space<vmem>>) attributes {dimension_semantics = [#tpu.dimension_semantics<parallel>], iteration_bounds = array<i64: 1>, scalar_prefetch = 0 : i64, scratch_operands = 0 : i64, tpu.core_type = #tpu.core_type<tc>, window_params = [{transform_indices = @transform_0, window_bounds = array<i64: 16, 128>}, {pipeline_mode = #tpu.pipeline_mode<synchronous>, transform_indices = @transform_1, window_bounds = array<i64: 1, 128>}, {pipeline_mode = #tpu.pipeline_mode<synchronous>, transform_indices = @transform_2, window_bounds = array<i64: 1, 128>}, {pipeline_mode = #tpu.pipeline_mode<synchronous>, transform_indices = @transform_3, window_bounds = array<i64: 16, 1>}, {pipeline_mode = #tpu.pipeline_mode<synchronous>, transform_indices = @transform_4, window_bounds = array<i64: 16, 1>}, {transform_indices = @transform_5, window_bounds = array<i64: 16, 128>}]} {
    %c0 = arith.constant 0 : index
    %c0_0 = arith.constant 0 : index
    %0 = vector.load %arg1[%c0, %c0_0] : memref<16x128xf32, #tpu.memory_space<vmem>>, vector<16x128xf32>
    %c0_1 = arith.constant 0 : index
    %c0_2 = arith.constant 0 : index
    %1 = vector.load %arg2[%c0_1, %c0_2] : memref<1x128xf32, #tpu.memory_space<vmem>>, vector<1x128xf32>
    %c0_3 = arith.constant 0 : index
    %c0_4 = arith.constant 0 : index
    %2 = vector.load %arg3[%c0_3, %c0_4] : memref<1x128xf32, #tpu.memory_space<vmem>>, vector<1x128xf32>
    %c0_5 = arith.constant 0 : index
    %c0_6 = arith.constant 0 : index
    %3 = vector.load %arg4[%c0_5, %c0_6] : memref<16x1xf32, #tpu.memory_space<vmem>>, vector<16x1xf32>
    %c0_7 = arith.constant 0 : index
    %c0_8 = arith.constant 0 : index
    %4 = vector.load %arg5[%c0_7, %c0_8] : memref<16x1xf32, #tpu.memory_space<vmem>>, vector<16x1xf32>
    %c1_i32 = arith.constant 1 : i32
    %5 = tpu.dynamic_rotate %0 by %c1_i32 dim 1 : vector<16x128xf32>, i32 -> vector<16x128xf32>
    %6 = vector.broadcast %1 : vector<1x128xf32> to vector<16x128xf32>
    %7 = arith.mulf %5, %6 : vector<16x128xf32>
    %c127_i32 = arith.constant 127 : i32
    %8 = tpu.dynamic_rotate %0 by %c127_i32 dim 1 : vector<16x128xf32>, i32 -> vector<16x128xf32>
    %9 = vector.broadcast %2 : vector<1x128xf32> to vector<16x128xf32>
    %10 = arith.mulf %8, %9 : vector<16x128xf32>
    %11 = arith.addf %7, %10 : vector<16x128xf32>
    %cst = arith.constant 5.250000e+00 : f32
    %12 = vector.broadcast %cst : f32 to vector<16x128xf32>
    %13 = arith.mulf %12, %0 : vector<16x128xf32>
    %cst_9 = arith.constant -7.500000e-01 : f32
    %14 = vector.broadcast %cst_9 : f32 to vector<16x128xf32>
    %15 = arith.mulf %14, %11 : vector<16x128xf32>
    %16 = arith.addf %13, %15 : vector<16x128xf32>
    %cst_10 = arith.constant -7.500000e-01 : f32
    %17 = vector.broadcast %cst_10 : f32 to vector<16x128xf32>
    %18 = arith.mulf %17, %0 : vector<16x128xf32>
    %cst_11 = arith.constant -5.000000e-01 : f32
    %19 = vector.broadcast %cst_11 : f32 to vector<16x128xf32>
    %20 = arith.mulf %19, %11 : vector<16x128xf32>
    %21 = arith.addf %18, %20 : vector<16x128xf32>
    %c1_i32_12 = arith.constant 1 : i32
    %22 = tpu.dynamic_rotate %21 by %c1_i32_12 dim 0 : vector<16x128xf32>, i32 -> vector<16x128xf32>
    %23 = vector.broadcast %3 : vector<16x1xf32> to vector<16x128xf32>
    %24 = arith.mulf %22, %23 : vector<16x128xf32>
    %c15_i32 = arith.constant 15 : i32
    %25 = tpu.dynamic_rotate %21 by %c15_i32 dim 0 : vector<16x128xf32>, i32 -> vector<16x128xf32>
    %26 = vector.broadcast %4 : vector<16x1xf32> to vector<16x128xf32>
    %27 = arith.mulf %25, %26 : vector<16x128xf32>
    %28 = arith.addf %16, %24 : vector<16x128xf32>
    %29 = arith.addf %28, %27 : vector<16x128xf32>
    %c0_13 = arith.constant 0 : index
    %c0_14 = arith.constant 0 : index
    %30 = vector.load %arg6[%c0_13, %c0_14] : memref<16x128xf32, #tpu.memory_space<vmem>>, vector<16x128xf32>
    tpu.vector_store %arg6[%c0_13, %c0_14], %29 {strides = array<i32>} : memref<16x128xf32, #tpu.memory_space<vmem>>, vector<16x128xf32>,
    return
  }
  func.func @transform_0(%arg0: i32) -> (i32, i32) {
    %c0_i32 = arith.constant 0 : i32
    %c0_i32_0 = arith.constant 0 : i32
    return %c0_i32, %arg0 : i32, i32
  }
  func.func @transform_1(%arg0: i32) -> (i32, i32) {
    %c0_i32 = arith.constant 0 : i32
    %c0_i32_0 = arith.constant 0 : i32
    %c0_i32_1 = arith.constant 0 : i32
    return %c0_i32, %c0_i32_0 : i32, i32
  }
  func.func @transform_2(%arg0: i32) -> (i32, i32) {
    %c0_i32 = arith.constant 0 : i32
    %c0_i32_0 = arith.constant 0 : i32
    %c0_i32_1 = arith.constant 0 : i32
    return %c0_i32, %c0_i32_0 : i32, i32
  }
  func.func @transform_3(%arg0: i32) -> (i32, i32) {
    %c0_i32 = arith.constant 0 : i32
    %c0_i32_0 = arith.constant 0 : i32
    %c0_i32_1 = arith.constant 0 : i32
    return %c0_i32, %c0_i32_0 : i32, i32
  }
  func.func @transform_4(%arg0: i32) -> (i32, i32) {
    %c0_i32 = arith.constant 0 : i32
    %c0_i32_0 = arith.constant 0 : i32
    %c0_i32_1 = arith.constant 0 : i32
    return %c0_i32, %c0_i32_0 : i32, i32
  }
  func.func @transform_5(%arg0: i32) -> (i32, i32) {
    %c0_i32 = arith.constant 0 : i32
    %c0_i32_0 = arith.constant 0 : i32
    return %c0_i32, %arg0 : i32, i32
  }
}

</mosaic_0001>

<llo_original>
// kernel: tpu_custom_call.1
$region0: #{tpu_custom_call.1}
  #allocation0 [shape = 'u32[]', space=smem, size = 0x4, offset = 0x4, fixed_abs, tag = 'smem constant byte address 0x4 - core index']
  #allocation1 [shape = 'u32[144,128]{1,0:T(1,128)}', space=vmem, size = 0x12000, scoped, tag = 'internal scratch']
  %s0 = inlined_call_operand.vmem [shape: f32[16,128], index: 0, kind: input, shape index: {}]
  %s1 = inlined_call_operand.vmem [shape: f32[1,128], index: 1, kind: input, shape index: {}]
  %s2 = inlined_call_operand.vmem [shape: f32[1,128], index: 2, kind: input, shape index: {}]
  %s3 = inlined_call_operand.vmem [shape: f32[16,1], index: 3, kind: input, shape index: {}]
  %s4 = inlined_call_operand.vmem [shape: f32[16,1], index: 4, kind: input, shape index: {}]
  %s5 = inlined_call_operand.hbm [shape: f32[16,128], index: 5, kind: output, shape index: {}]
  %s6 = sld [smem:[#allocation0]]
  $region30: #{tpu_custom_call.1} parent=0
    _
  %s8 = ssub.s32 1, %s6
  %s9 = scalar_select 0, %s8, %s6
  $region1: #{tpu_custom_call.1} parent=0
    #allocation2 [shape = 'u8[8192]{0}', space=vmem, size = 0x2000, scoped, tag = 'output window, operand 0, single buffered']
    #allocation3 [shape = 's32[1]{0}', space=sflag, size = 0x4, scoped, tag = 'scoped memory for tpu_custom_call.1']
    %10 = vsyncpa [#allocation3], 0
    // Predicated region
    $region2: #{tpu_custom_call.1} parent=1 // pred_check
      _
    $region3: #{tpu_custom_call.1} parent=1 // pred_check_branch
      %12 = sbr.rel (0) target = $region5
    $region4: #{tpu_custom_call.1} parent=1 // pred_region
      _
    $region5: #{tpu_custom_call.1} parent=1 // pred_fallthru
      _
    // Predicated region
    $region6: #{tpu_custom_call.1} parent=1 // pred_check
      _
    $region7: #{tpu_custom_call.1} parent=1 // pred_check_branch
      %14 = sbr.rel (0) target = $region9
    $region8: #{tpu_custom_call.1} parent=1 // pred_region
      _
    $region9: #{tpu_custom_call.1} parent=1 // pred_fallthru
      _
    // Predicated region
    $region10: #{tpu_custom_call.1} parent=1 // pred_check
      _
    $region11: #{tpu_custom_call.1} parent=1 // pred_check_branch
      %16 = sbr.rel (0) target = $region13
    $region12: #{tpu_custom_call.1} parent=1 // pred_region
      _
    $region13: #{tpu_custom_call.1} parent=1 // pred_fallthru
      _
    // Predicated region
    $region14: #{tpu_custom_call.1} parent=1 // pred_check
      _
    $region15: #{tpu_custom_call.1} parent=1 // pred_check_branch
      %18 = sbr.rel (0) target = $region17
    $region16: #{tpu_custom_call.1} parent=1 // pred_region
      _
    $region17: #{tpu_custom_call.1} parent=1 // pred_fallthru
      _
    // Predicated region
    $region18: #{tpu_custom_call.1} parent=1 // pred_check
      _
    $region19: #{tpu_custom_call.1} parent=1 // pred_check_branch
      %20 = sbr.rel (0) target = $region21
    $region20: #{tpu_custom_call.1} parent=1 // pred_region
      _
    $region21: #{tpu_custom_call.1} parent=1 // pred_fallthru
      _
    %v21 = vld [vmem:[%s0] sm:$0xff]
    %v22 = vld [vmem:[%s0 + $0x8] sm:$0xff]
    %v23 = vld [vmem:[%s1] sm:$0x1]
    %v24 = vld [vmem:[%s2] sm:$0x1]
    %v25 = vld [vmem:[%s3] sm:$0xff]
    %v26 = vld [vmem:[%s3 + $0x8] sm:$0xff]
    %v27 = vld [vmem:[%s4] sm:$0xff]
    %v28 = vld [vmem:[%s4 + $0x8] sm:$0xff]
    %29 = vrot.lane.b32.xlu0 %v21, 1
    %v30 = vpop.permute.xlu0 %29
    %31 = vrot.lane.b32.xlu0 %v22, 1
    %v32 = vpop.permute.xlu0 %31
    %v34 = vlaneseq
    %v35 = vshrl.u32 %v34, 7
    %v36 = vsub.s32 0, %v35
    %v37 = vrot.slane %v23, %v36
    %v39 = vmul.f32 %v30, %v37
    %v40 = vmul.f32 %v32, %v37
    %41 = vrot.lane.b32.xlu0 %v21, 127
    %v42 = vpop.permute.xlu0 %41
    %43 = vrot.lane.b32.xlu0 %v22, 127
    %v44 = vpop.permute.xlu0 %43
    %v46 = vlaneseq
    %v47 = vshrl.u32 %v46, 7
    %v48 = vsub.s32 0, %v47
    %v49 = vrot.slane %v24, %v48
    %v51 = vmul.f32 %v42, %v49
    %v52 = vmul.f32 %v44, %v49
    %v53 = vadd.f32 %v39, %v51
    %v54 = vadd.f32 %v40, %v52
    %v55 = vmul.f32 %v21, 5.25
    %v56 = vmul.f32 %v22, 5.25
    %v57 = vmul.f32 %v53, -0.75
    %v58 = vmul.f32 %v54, -0.75
    %v59 = vadd.f32 %v55, %v57
    %v60 = vadd.f32 %v56, %v58
    %v61 = vmul.f32 %v21, -0.75
    %v62 = vmul.f32 %v22, -0.75
    %v63 = vmul.f32 %v53, -0.5
    %v64 = vmul.f32 %v54, -0.5
    %v65 = vadd.f32 %v61, %v63
    %v66 = vadd.f32 %v62, %v64
    %v67 = vrot.slane %v65, 7
    %v68 = vrot.slane %v66, 7
    %v69 = vlaneseq
    %v70 = vshrl.u32 %v69, 7
    %vm71 = vcmp.lt.s32.totalorder %v70, 1
    %v72 = vsel %vm71, %v67, %v68
    %v73 = vsel %vm71, %v68, %v67
    %75 = vset.pattern.permute.xlu0 0
    %76 = vperm.xlu0 %75, %v25
    %v77 = vpop.permute.xlu0 %76
    %80 = vset.pattern.permute.xlu0 0
    %81 = vperm.xlu0 %80, %v26
    %v82 = vpop.permute.xlu0 %81
    %v84 = vmul.f32 %v73, %v77
    %v85 = vmul.f32 %v72, %v82
    %v86 = vrot.slane %v65, 1
    %v87 = vrot.slane %v66, 1
    %vm88 = vcmp.lt.s32.totalorder %v70, 7
    %v89 = vsel %vm88, %v86, %v87
    %v90 = vsel %vm88, %v87, %v86
    %92 = vset.pattern.permute.xlu0 0
    %93 = vperm.xlu0 %92, %v27
    %v94 = vpop.permute.xlu0 %93
    %97 = vset.pattern.permute.xlu0 0
    %98 = vperm.xlu0 %97, %v28
    %v99 = vpop.permute.xlu0 %98
    %v101 = vmul.f32 %v89, %v94
    %v102 = vmul.f32 %v90, %v99
    %v103 = vadd.f32 %v59, %v84
    %v104 = vadd.f32 %v60, %v85
    %v105 = vadd.f32 %v103, %v101
    %v106 = vadd.f32 %v104, %v102
    %107 = vst [vmem:[#allocation2] sm:$0xff] %v105
    %108 = vst [vmem:[#allocation2 + $0x8] sm:$0xff] %v106
    // Predicated region
    $region22: #{tpu_custom_call.1} parent=1 // pred_check
      _
    $region23: #{tpu_custom_call.1} parent=1 // pred_check_branch
      %110 = sbr.rel (0) target = $region25
    $region24: #{tpu_custom_call.1} parent=1 // pred_region
      %s112 = ssub.s32 256, 256
      %113 = vsyncadd [#allocation3], %s112
      %s114 = sshll.u32 [#allocation2], 4
      %s115 = int_to_ptr.vmem [resolvable:$true] %s114
      %120 = dma.vmem_to_hbm [thread:$0]  %s115, 256, %s5, [#allocation3], 128, 128, 8
    $region25: #{tpu_custom_call.1} parent=1 // pred_fallthru
      _
    // Predicated region
    $region26: #{tpu_custom_call.1} parent=1 // pred_check
      _
    $region27: #{tpu_custom_call.1} parent=1 // pred_check_branch
      %122 = sbr.rel (0) target = $region29
    $region28: #{tpu_custom_call.1} parent=1 // pred_region
      %123 = dma.done [#allocation3], 256
    $region29: #{tpu_custom_call.1} parent=1 // pred_fallthru
      _
    %124 = vsyncpa [#allocation3], 1

</llo_original>
